<compile_context>
chip_gen: v7x
topology: tpu7x:2x2x1
jax: 0.10.0
libtpu: 0.0.40
codegen_flags: <defaults>
</compile_context>

<pallas_src>
import jax
import jax.numpy as jnp
from jax.experimental import pallas as pl
from jax.experimental.pallas import tpu as pltpu

LANES = 128        # lane-dense width for in-VMEM intermediates
IN_PAD = 8         # HBM-side input / output lane width (>= all of 8, 3)
W1_OFF, W1_ROWS = 0, 8      # rows  0..7  : W1 (in rows 0..7,  out cols 0..15)
W2_OFF, W2_ROWS = 8, 16     # rows  8..23 : W2 (in rows 0..15, out cols 0..7)
W3_OFF, W3_ROWS = 24, 8     # rows 24..31 : W3 (in rows 0..7,  out cols 0..2)
B_OFF = 32                  # rows 32..39 : bias block (row 0=b1, 1=b2, 2=b3)
SLAB_ROWS = 40              # multiple of 8


def simplenet_kernel(x_ref, p_ref, out_ref):
    x = x_ref[...]                                     # (tb, 8) narrow input
    w1 = p_ref[W1_OFF:W1_OFF + W1_ROWS, :]             # (8, 128)
    w2 = p_ref[W2_OFF:W2_OFF + W2_ROWS, :]             # (16, 128)
    w3 = p_ref[W3_OFF:W3_OFF + W3_ROWS, :]             # (8, 128)
    b = p_ref[B_OFF:B_OFF + 8, :]                      # (8, 128) bias block

    # Layer 1: Linear(8->16) + ReLU; K=8, lane-dense (tb,128) result.
    h1 = jnp.maximum(
        jnp.dot(x, w1, preferred_element_type=jnp.float32) + b[0:1, :], 0.0)
    # Layer 2: Linear(16->8) + ReLU; contract only the 16 live lanes of h1.
    h2 = jnp.maximum(
        jnp.dot(h1[:, :W2_ROWS], w2,
                preferred_element_type=jnp.float32) + b[1:2, :], 0.0)
    # Layer 3: Linear(8->3), no activation; contract only the 8 live lanes.
    out = jnp.dot(h2[:, :W3_ROWS], w3,
                  preferred_element_type=jnp.float32) + b[2:3, :]
    # Narrow store back to HBM: cols 3..7 are exactly zero (zero weight/bias).
    out_ref[...] = out[:, :IN_PAD].astype(out_ref.dtype)


def pack_params(p):
    """Pack (in,out) weights and (1,out) biases into one (40,128) f32 slab."""
    slab = jnp.zeros((SLAB_ROWS, LANES), jnp.float32)
    slab = slab.at[W1_OFF:W1_OFF + p["w1"].shape[0], :p["w1"].shape[1]].set(p["w1"])
    slab = slab.at[W2_OFF:W2_OFF + p["w2"].shape[0], :p["w2"].shape[1]].set(p["w2"])
    slab = slab.at[W3_OFF:W3_OFF + p["w3"].shape[0], :p["w3"].shape[1]].set(p["w3"])
    slab = slab.at[B_OFF + 0, :p["b1"].shape[1]].set(p["b1"][0])
    slab = slab.at[B_OFF + 1, :p["b2"].shape[1]].set(p["b2"][0])
    slab = slab.at[B_OFF + 2, :p["b3"].shape[1]].set(p["b3"][0])
    return slab


def simplenet_forward(x, param_slab, *, out_features=3, block_b=2048):
    """x: (B, in_features<=8) f32. param_slab: (40,128) f32 from pack_params."""
    B, F = x.shape
    assert F <= IN_PAD
    # Pad batch rows to a multiple of 8 (sublane); pick a batch tile that is
    # <= block_b and <= ceil(bp/2) (rounded to 8) so there are always >= 2
    # grid steps on the "parallel" axis (keeps both v7x TensorCores busy);
    # then round the batch up to a multiple of the tile.
    bp8 = max(8, ((B + 7) // 8) * 8)
    tb = max(8, min(block_b, 8 * pl.cdiv(bp8, 16)))
    bp = pl.cdiv(bp8, tb) * tb
    if bp != B or F != IN_PAD:
        x = jnp.pad(x, ((0, bp - B), (0, IN_PAD - F)))  # tiny, 8-lane pad only

    out_padded = pl.pallas_call(
        simplenet_kernel,
        out_shape=jax.ShapeDtypeStruct((bp, IN_PAD), jnp.float32),
        grid_spec=pltpu.PrefetchScalarGridSpec(
            num_scalar_prefetch=0,
            grid=(bp // tb,),
            in_specs=[
                pl.BlockSpec((tb, IN_PAD), lambda i: (i, 0)),         # x tile
                pl.BlockSpec((SLAB_ROWS, LANES), lambda i: (0, 0)),   # resident weights
            ],
            out_specs=pl.BlockSpec((tb, IN_PAD), lambda i: (i, 0)),
        ),
        compiler_params=pltpu.CompilerParams(
            dimension_semantics=("parallel",)),
    )(x, param_slab)
    return out_padded[:B, :out_features]


def init_params(key, input_size=8, hidden_sizes=(16, 8), output_size=3):
    """Deterministic init mimicking nn.Linear's U(-1/sqrt(in), 1/sqrt(in))."""
    params = {}
    sizes = [input_size, *hidden_sizes, output_size]
    for i in range(len(sizes) - 1):
        fan_in, fan_out = sizes[i], sizes[i + 1]
        key, kw, kb = jax.random.split(key, 3)
        bound = 1.0 / jnp.sqrt(jnp.float32(fan_in))
        params[f"w{i+1}"] = jax.random.uniform(
            kw, (fan_in, fan_out), jnp.float32, -bound, bound)
        params[f"b{i+1}"] = jax.random.uniform(
            kb, (1, fan_out), jnp.float32, -bound, bound)
    return params


def reference_forward(x, p):
    h1 = jnp.maximum(x @ p["w1"] + p["b1"], 0.0)
    h2 = jnp.maximum(h1 @ p["w2"] + p["b2"], 0.0)
    return h2 @ p["w3"] + p["b3"]


if __name__ == "__main__":
    key = jax.random.PRNGKey(0)
    key, kx = jax.random.split(key)
    batch, input_size = 4, 8
    x = jax.random.normal(kx, (batch, input_size), jnp.float32)
    params = init_params(key, input_size=8, hidden_sizes=(16, 8), output_size=3)
    slab = pack_params(params)

    out = simplenet_forward(x, slab)
    out = jax.block_until_ready(out)

    ref = reference_forward(x, params)
    assert out.shape == (batch, 3)
    assert jnp.allclose(out, ref, atol=1e-5, rtol=1e-5)
    print("KERNEL_OK")
</pallas_src>

<mosaic_0001>
module attributes {stable_mosaic.version = 11 : i64} {
  func.func @simplenet_kernel(%arg0: i32, %arg1: memref<8x8xf32, #tpu.memory_space<vmem>>, %arg2: memref<40x128xf32, #tpu.memory_space<vmem>>, %arg3: memref<8x8xf32, #tpu.memory_space<vmem>>) attributes {dimension_semantics = [#tpu.dimension_semantics<parallel>], iteration_bounds = array<i64: 1>, scalar_prefetch = 0 : i64, scratch_operands = 0 : i64, tpu.core_type = #tpu.core_type<tc>, window_params = [{transform_indices = @transform_0, window_bounds = array<i64: 8, 8>}, {pipeline_mode = #tpu.pipeline_mode<synchronous>, transform_indices = @transform_1, window_bounds = array<i64: 40, 128>}, {transform_indices = @transform_2, window_bounds = array<i64: 8, 8>}]} {
    %c0 = arith.constant 0 : index
    %c0_0 = arith.constant 0 : index
    %0 = vector.load %arg1[%c0, %c0_0] : memref<8x8xf32, #tpu.memory_space<vmem>>, vector<8x8xf32>
    %c0_1 = arith.constant 0 : index
    %c0_2 = arith.constant 0 : index
    %1 = vector.load %arg2[%c0_1, %c0_2] : memref<40x128xf32, #tpu.memory_space<vmem>>, vector<8x128xf32>
    %c8 = arith.constant 8 : index
    %c0_3 = arith.constant 0 : index
    %2 = vector.load %arg2[%c8, %c0_3] : memref<40x128xf32, #tpu.memory_space<vmem>>, vector<16x128xf32>
    %c24 = arith.constant 24 : index
    %c0_4 = arith.constant 0 : index
    %3 = vector.load %arg2[%c24, %c0_4] : memref<40x128xf32, #tpu.memory_space<vmem>>, vector<8x128xf32>
    %c32 = arith.constant 32 : index
    %c0_5 = arith.constant 0 : index
    %4 = vector.load %arg2[%c32, %c0_5] : memref<40x128xf32, #tpu.memory_space<vmem>>, vector<8x128xf32>
    %cst = arith.constant dense<0.000000e+00> : vector<8x128xf32>
    %5 = tpu.matmul %0, %1, %cst {dimension_numbers = #tpu.dot_dimension_numbers<[1], [0], [0], [1], [0, 0, 1, 1], [], []>} : vector<8x8xf32>, vector<8x128xf32>, vector<8x128xf32> -> vector<8x128xf32>
    %6 = vector.extract_strided_slice %4 {offsets = [0, 0], sizes = [1, 128], strides = [1, 1]} : vector<8x128xf32> to vector<1x128xf32>
    %7 = vector.broadcast %6 : vector<1x128xf32> to vector<8x128xf32>
    %8 = arith.addf %5, %7 : vector<8x128xf32>
    %cst_6 = arith.constant 0.000000e+00 : f32
    %9 = vector.broadcast %cst_6 : f32 to vector<8x128xf32>
    %10 = arith.maximumf %8, %9 : vector<8x128xf32>
    %11 = vector.extract_strided_slice %10 {offsets = [0, 0], sizes = [8, 16], strides = [1, 1]} : vector<8x128xf32> to vector<8x16xf32>
    %cst_7 = arith.constant dense<0.000000e+00> : vector<8x128xf32>
    %12 = tpu.matmul %11, %2, %cst_7 {dimension_numbers = #tpu.dot_dimension_numbers<[1], [0], [0], [1], [0, 0, 1, 1], [], []>} : vector<8x16xf32>, vector<16x128xf32>, vector<8x128xf32> -> vector<8x128xf32>
    %13 = vector.extract_strided_slice %4 {offsets = [1, 0], sizes = [1, 128], strides = [1, 1]} : vector<8x128xf32> to vector<1x128xf32>
    %14 = vector.broadcast %13 : vector<1x128xf32> to vector<8x128xf32>
    %15 = arith.addf %12, %14 : vector<8x128xf32>
    %cst_8 = arith.constant 0.000000e+00 : f32
    %16 = vector.broadcast %cst_8 : f32 to vector<8x128xf32>
    %17 = arith.maximumf %15, %16 : vector<8x128xf32>
    %18 = vector.extract_strided_slice %17 {offsets = [0, 0], sizes = [8, 8], strides = [1, 1]} : vector<8x128xf32> to vector<8x8xf32>
    %cst_9 = arith.constant dense<0.000000e+00> : vector<8x128xf32>
    %19 = tpu.matmul %18, %3, %cst_9 {dimension_numbers = #tpu.dot_dimension_numbers<[1], [0], [0], [1], [0, 0, 1, 1], [], []>} : vector<8x8xf32>, vector<8x128xf32>, vector<8x128xf32> -> vector<8x128xf32>
    %20 = vector.extract_strided_slice %4 {offsets = [2, 0], sizes = [1, 128], strides = [1, 1]} : vector<8x128xf32> to vector<1x128xf32>
    %21 = vector.broadcast %20 : vector<1x128xf32> to vector<8x128xf32>
    %22 = arith.addf %19, %21 : vector<8x128xf32>
    %23 = vector.extract_strided_slice %22 {offsets = [0, 0], sizes = [8, 8], strides = [1, 1]} : vector<8x128xf32> to vector<8x8xf32>
    %c0_10 = arith.constant 0 : index
    %c0_11 = arith.constant 0 : index
    %24 = vector.load %arg3[%c0_10, %c0_11] : memref<8x8xf32, #tpu.memory_space<vmem>>, vector<8x8xf32>
    tpu.vector_store %arg3[%c0_10, %c0_11], %23 {strides = array<i32>} : memref<8x8xf32, #tpu.memory_space<vmem>>, vector<8x8xf32>,
    return
  }
  func.func @transform_0(%arg0: i32) -> (i32, i32) {
    %c0_i32 = arith.constant 0 : i32
    %c0_i32_0 = arith.constant 0 : i32
    return %arg0, %c0_i32 : i32, i32
  }
  func.func @transform_1(%arg0: i32) -> (i32, i32) {
    %c0_i32 = arith.constant 0 : i32
    %c0_i32_0 = arith.constant 0 : i32
    %c0_i32_1 = arith.constant 0 : i32
    return %c0_i32, %c0_i32_0 : i32, i32
  }
  func.func @transform_2(%arg0: i32) -> (i32, i32) {
    %c0_i32 = arith.constant 0 : i32
    %c0_i32_0 = arith.constant 0 : i32
    return %arg0, %c0_i32 : i32, i32
  }
}

</mosaic_0001>

<llo_original>
// kernel: tpu_custom_call.1
$region0: #{tpu_custom_call.1}
  #allocation0 [shape = 'u32[]', space=smem, size = 0x4, offset = 0x4, fixed_abs, tag = 'smem constant byte address 0x4 - core index']
  #allocation1 [shape = 'u32[144,128]{1,0:T(1,128)}', space=vmem, size = 0x12000, scoped, tag = 'internal scratch']
  %s0 = inlined_call_operand.hbm [shape: f32[8,8], index: 0, kind: input, shape index: {}]
  %s1 = inlined_call_operand.hbm [shape: f32[40,128], index: 1, kind: input, shape index: {}]
  %s2 = inlined_call_operand.hbm [shape: f32[8,8], index: 2, kind: output, shape index: {}]
  %s3 = sld [smem:[#allocation0]]
  $region26: #{tpu_custom_call.1} parent=0
    _
  %s5 = ssub.s32 1, %s3
  %s6 = scalar_select 0, %s5, %s3
  $region1: #{tpu_custom_call.1} parent=0
    #allocation2 [shape = 'u8[4096]{0}', space=vmem, size = 0x1000, scoped, tag = 'input window, operand 0, single buffered']
    #allocation3 [shape = 's32[1]{0}', space=sflag, size = 0x4, scoped, tag = 'scoped memory for tpu_custom_call.1']
    #allocation4 [shape = 's32[1]{0}', space=sflag, size = 0x4, scoped, tag = 'scoped memory for tpu_custom_call.1']
    #allocation5 [shape = 'u8[20480]{0}', space=vmem, size = 0x5000, scoped, tag = 'input window, operand 1, single buffered']
    #allocation6 [shape = 's32[1]{0}', space=sflag, size = 0x4, scoped, tag = 'scoped memory for tpu_custom_call.1']
    #allocation7 [shape = 'u8[4096]{0}', space=vmem, size = 0x1000, scoped, tag = 'output window, operand 0, single buffered']
    %7 = vsyncpa [#allocation3], 0
    %8 = vsyncpa [#allocation6], 0
    %9 = vsyncpa [#allocation4], 0
    // Predicated region
    $region2: #{tpu_custom_call.1} parent=1 // pred_check
      _
    $region3: #{tpu_custom_call.1} parent=1 // pred_check_branch
      %11 = sbr.rel (0) target = $region5
    $region4: #{tpu_custom_call.1} parent=1 // pred_region
      %s13 = ssub.s32 128, 128
      %14 = vsyncadd [#allocation3], %s13
      %s16 = sshll.u32 [#allocation2], 4
      %s17 = int_to_ptr.vmem [resolvable:$true] %s16
      %19 = dma.hbm_to_vmem [thread:$0]  %s0, 128, %s17, [#allocation3]
    $region5: #{tpu_custom_call.1} parent=1 // pred_fallthru
      _
    // Predicated region
    $region6: #{tpu_custom_call.1} parent=1 // pred_check
      _
    $region7: #{tpu_custom_call.1} parent=1 // pred_check_branch
      %21 = sbr.rel (0) target = $region9
    $region8: #{tpu_custom_call.1} parent=1 // pred_region
      %s23 = ssub.s32 640, 640
      %24 = vsyncadd [#allocation6], %s23
      %s25 = sshll.u32 [#allocation5], 4
      %s26 = int_to_ptr.vmem [resolvable:$true] %s25
      %31 = dma.hbm_to_vmem [thread:$0]  %s1, 640, %s26, [#allocation6], 128, 128, 8
    $region9: #{tpu_custom_call.1} parent=1 // pred_fallthru
      _
    // Predicated region
    $region10: #{tpu_custom_call.1} parent=1 // pred_check
      _
    $region11: #{tpu_custom_call.1} parent=1 // pred_check_branch
      %33 = sbr.rel (0) target = $region13
    $region12: #{tpu_custom_call.1} parent=1 // pred_region
      %34 = dma.done [#allocation3], 128
    $region13: #{tpu_custom_call.1} parent=1 // pred_fallthru
      _
    // Predicated region
    $region14: #{tpu_custom_call.1} parent=1 // pred_check
      _
    $region15: #{tpu_custom_call.1} parent=1 // pred_check_branch
      %36 = sbr.rel (0) target = $region17
    $region16: #{tpu_custom_call.1} parent=1 // pred_region
      %37 = dma.done [#allocation6], 640
    $region17: #{tpu_custom_call.1} parent=1 // pred_fallthru
      _
    %v38 = vld [vmem:[#allocation2] sm:$0xff]
    %v39 = vld [vmem:[#allocation5] sm:$0xff]
    %v40 = vld [vmem:[#allocation5 + $0x8] sm:$0xff]
    %v41 = vld [vmem:[#allocation5 + $0x10] sm:$0xff]
    %v42 = vld [vmem:[#allocation5 + $0x18] sm:$0xff]
    %v43 = vld [vmem:[#allocation5 + $0x20] sm:$0xff]
    %v44 = vlaneseq
    %v45 = vshrl.u32 %v44, 7
    %v46 = vsub.s32 0, %v45
    %v47 = vrot.slane %v43, %v46
    %vm48 = vcmask 64512
    %v50 = vsel %vm48, %v38, 0
    %52 = vmatprep.subr.mxu0 0.0
    %53 = vmatpush1.msra.mxu0 %v39
    %54 = vmatprep.subr.mxu0 0.0
    %55 = vmatpush1.msra.mxu0 0.0
    %56 = vmatprep.subr.mxu0 0.0
    %57 = vmatpush1.msra.mxu0 0.0
    %58 = vmatprep.subr.mxu0 0.0
    %59 = vmatpush1.msra.mxu0 0.0
    %60 = vmatprep.subr.mxu0 0.0
    %61 = vmatpush1.msra.mxu0 0.0
    %62 = vmatprep.subr.mxu0 0.0
    %63 = vmatpush1.msra.mxu0 0.0
    %64 = vmatprep.subr.mxu0 0.0
    %65 = vmatpush1.msra.mxu0 0.0
    %66 = vmatprep.subr.mxu0 0.0
    %67 = vmatpush1.msra.mxu0 0.0
    %68 = vmatprep.subr.mxu0 0.0
    %69 = vmatpush1.msra.mxu0 0.0
    %70 = vmatprep.subr.mxu0 0.0
    %71 = vmatpush1.msra.mxu0 0.0
    %72 = vmatprep.subr.mxu0 0.0
    %73 = vmatpush1.msra.mxu0 0.0
    %74 = vmatprep.subr.mxu0 0.0
    %75 = vmatpush1.msra.mxu0 0.0
    %76 = vmatprep.subr.mxu0 0.0
    %77 = vmatpush1.msra.mxu0 0.0
    %78 = vmatprep.subr.mxu0 0.0
    %79 = vmatpush1.msra.mxu0 0.0
    %80 = vmatprep.subr.mxu0 0.0
    %81 = vmatpush1.msra.mxu0 0.0
    %82 = vmatprep.subr.mxu0 0.0
    %83 = vmatpush1.msra.mxu0 0.0
    %84 = vmatprep.subr.mxu0 0.0
    %85 = vmatpush1.msra.mxu0 0.0
    %86 = vmatprep.subr.mxu0 0.0
    %87 = vmatpush1.msra.mxu0 0.0
    %88 = vmatprep.subr.mxu0 0.0
    %89 = vmatpush1.msra.mxu0 0.0
    %90 = vmatprep.subr.mxu0 0.0
    %91 = vmatpush1.msra.mxu0 0.0
    %92 = vmatprep.subr.mxu0 0.0
    %93 = vmatpush1.msra.mxu0 0.0
    %94 = vmatprep.subr.mxu0 0.0
    %95 = vmatpush1.msra.mxu0 0.0
    %96 = vmatprep.subr.mxu0 0.0
    %97 = vmatpush1.msra.mxu0 0.0
    %98 = vmatprep.subr.mxu0 0.0
    %99 = vmatpush1.msra.mxu0 0.0
    %100 = vmatprep.subr.mxu0 0.0
    %101 = vmatpush1.msra.mxu0 0.0
    %102 = vmatprep.subr.mxu0 0.0
    %103 = vmatpush1.msra.mxu0 0.0
    %104 = vmatprep.subr.mxu0 0.0
    %105 = vmatpush1.msra.mxu0 0.0
    %106 = vmatprep.subr.mxu0 0.0
    %107 = vmatpush1.msra.mxu0 0.0
    %108 = vmatprep.subr.mxu0 0.0
    %109 = vmatpush1.msra.mxu0 0.0
    %110 = vmatprep.subr.mxu0 0.0
    %111 = vmatpush1.msra.mxu0 0.0
    %112 = vmatprep.subr.mxu0 0.0
    %113 = vmatpush1.msra.mxu0 0.0
    %114 = vmatprep.subr.mxu0 0.0
    %115 = vmatpush1.msra.mxu0 0.0
    %116 = vmatprep.mubr.f32.mxu0 0.0
    %117 = vmatmul.mubr.f32.gmra.mrb[0].mxu0 %v50
    %v118 = vpop.f32.mrb[0].mxu0
    %v119 = vadd.f32 %v47, %v118
    %v120 = vpop.f32.mrb[0].mxu0
    %121 = vdwg.mxu0
    %v122 = vmax.f32 %v119, 0.0
    %v123 = vlaneseq
    %v124 = vshrl.u32 %v123, 7
    %v125 = vsub.s32 1, %v124
    %v126 = vrot.slane %v43, %v125
    %vm127 = vcmask 130048
    %v129 = vsel %vm127, %v122, 0
    %131 = vmatprep.subr.mxu0 0.0
    %132 = vmatpush1.msra.mxu0 %v40
    %133 = vmatprep.subr.mxu0 0.0
    %134 = vmatpush1.msra.mxu0 %v41
    %135 = vmatprep.subr.mxu0 0.0
    %136 = vmatpush1.msra.mxu0 0.0
    %137 = vmatprep.subr.mxu0 0.0
    %138 = vmatpush1.msra.mxu0 0.0
    %139 = vmatprep.subr.mxu0 0.0
    %140 = vmatpush1.msra.mxu0 0.0
    %141 = vmatprep.subr.mxu0 0.0
    %142 = vmatpush1.msra.mxu0 0.0
    %143 = vmatprep.subr.mxu0 0.0
    %144 = vmatpush1.msra.mxu0 0.0
    %145 = vmatprep.subr.mxu0 0.0
    %146 = vmatpush1.msra.mxu0 0.0
    %147 = vmatprep.subr.mxu0 0.0
    %148 = vmatpush1.msra.mxu0 0.0
    %149 = vmatprep.subr.mxu0 0.0
    %150 = vmatpush1.msra.mxu0 0.0
    %151 = vmatprep.subr.mxu0 0.0
    %152 = vmatpush1.msra.mxu0 0.0
    %153 = vmatprep.subr.mxu0 0.0
    %154 = vmatpush1.msra.mxu0 0.0
    %155 = vmatprep.subr.mxu0 0.0
    %156 = vmatpush1.msra.mxu0 0.0
    %157 = vmatprep.subr.mxu0 0.0
    %158 = vmatpush1.msra.mxu0 0.0
    %159 = vmatprep.subr.mxu0 0.0
    %160 = vmatpush1.msra.mxu0 0.0
    %161 = vmatprep.subr.mxu0 0.0
    %162 = vmatpush1.msra.mxu0 0.0
    %163 = vmatprep.subr.mxu0 0.0
    %164 = vmatpush1.msra.mxu0 0.0
    %165 = vmatprep.subr.mxu0 0.0
    %166 = vmatpush1.msra.mxu0 0.0
    %167 = vmatprep.subr.mxu0 0.0
    %168 = vmatpush1.msra.mxu0 0.0
    %169 = vmatprep.subr.mxu0 0.0
    %170 = vmatpush1.msra.mxu0 0.0
    %171 = vmatprep.subr.mxu0 0.0
    %172 = vmatpush1.msra.mxu0 0.0
    %173 = vmatprep.subr.mxu0 0.0
    %174 = vmatpush1.msra.mxu0 0.0
    %175 = vmatprep.subr.mxu0 0.0
    %176 = vmatpush1.msra.mxu0 0.0
    %177 = vmatprep.subr.mxu0 0.0
    %178 = vmatpush1.msra.mxu0 0.0
    %179 = vmatprep.subr.mxu0 0.0
    %180 = vmatpush1.msra.mxu0 0.0
    %181 = vmatprep.subr.mxu0 0.0
    %182 = vmatpush1.msra.mxu0 0.0
    %183 = vmatprep.subr.mxu0 0.0
    %184 = vmatpush1.msra.mxu0 0.0
    %185 = vmatprep.subr.mxu0 0.0
    %186 = vmatpush1.msra.mxu0 0.0
    %187 = vmatprep.subr.mxu0 0.0
    %188 = vmatpush1.msra.mxu0 0.0
    %189 = vmatprep.subr.mxu0 0.0
    %190 = vmatpush1.msra.mxu0 0.0
    %191 = vmatprep.subr.mxu0 0.0
    %192 = vmatpush1.msra.mxu0 0.0
    %193 = vmatprep.subr.mxu0 0.0
    %194 = vmatpush1.msra.mxu0 0.0
    %195 = vmatprep.mubr.f32.mxu0 0.0
    %196 = vmatmul.mubr.f32.gmra.mrb[0].mxu0 %v129
    %v197 = vpop.f32.mrb[0].mxu0
    %v198 = vadd.f32 %v126, %v197
    %v199 = vpop.f32.mrb[0].mxu0
    %200 = vdwg.mxu0
    %v201 = vmax.f32 %v198, 0.0
    %v202 = vlaneseq
    %v203 = vshrl.u32 %v202, 7
    %v204 = vsub.s32 2, %v203
    %v205 = vrot.slane %v43, %v204
    %v207 = vsel %vm48, %v201, 0
    %209 = vmatprep.subr.mxu0 0.0
    %210 = vmatpush1.msra.mxu0 %v42
    %211 = vmatprep.subr.mxu0 0.0
    %212 = vmatpush1.msra.mxu0 0.0
    %213 = vmatprep.subr.mxu0 0.0
    %214 = vmatpush1.msra.mxu0 0.0
    %215 = vmatprep.subr.mxu0 0.0
    %216 = vmatpush1.msra.mxu0 0.0
    %217 = vmatprep.subr.mxu0 0.0
    %218 = vmatpush1.msra.mxu0 0.0
    %219 = vmatprep.subr.mxu0 0.0
    %220 = vmatpush1.msra.mxu0 0.0
    %221 = vmatprep.subr.mxu0 0.0
    %222 = vmatpush1.msra.mxu0 0.0
    %223 = vmatprep.subr.mxu0 0.0
    %224 = vmatpush1.msra.mxu0 0.0
    %225 = vmatprep.subr.mxu0 0.0
    %226 = vmatpush1.msra.mxu0 0.0
    %227 = vmatprep.subr.mxu0 0.0
    %228 = vmatpush1.msra.mxu0 0.0
    %229 = vmatprep.subr.mxu0 0.0
    %230 = vmatpush1.msra.mxu0 0.0
    %231 = vmatprep.subr.mxu0 0.0
    %232 = vmatpush1.msra.mxu0 0.0
    %233 = vmatprep.subr.mxu0 0.0
    %234 = vmatpush1.msra.mxu0 0.0
    %235 = vmatprep.subr.mxu0 0.0
    %236 = vmatpush1.msra.mxu0 0.0
    %237 = vmatprep.subr.mxu0 0.0
    %238 = vmatpush1.msra.mxu0 0.0
    %239 = vmatprep.subr.mxu0 0.0
    %240 = vmatpush1.msra.mxu0 0.0
    %241 = vmatprep.subr.mxu0 0.0
    %242 = vmatpush1.msra.mxu0 0.0
    %243 = vmatprep.subr.mxu0 0.0
    %244 = vmatpush1.msra.mxu0 0.0
    %245 = vmatprep.subr.mxu0 0.0
    %246 = vmatpush1.msra.mxu0 0.0
    %247 = vmatprep.subr.mxu0 0.0
    %248 = vmatpush1.msra.mxu0 0.0
    %249 = vmatprep.subr.mxu0 0.0
    %250 = vmatpush1.msra.mxu0 0.0
    %251 = vmatprep.subr.mxu0 0.0
    %252 = vmatpush1.msra.mxu0 0.0
    %253 = vmatprep.subr.mxu0 0.0
    %254 = vmatpush1.msra.mxu0 0.0
    %255 = vmatprep.subr.mxu0 0.0
    %256 = vmatpush1.msra.mxu0 0.0
    %257 = vmatprep.subr.mxu0 0.0
    %258 = vmatpush1.msra.mxu0 0.0
    %259 = vmatprep.subr.mxu0 0.0
    %260 = vmatpush1.msra.mxu0 0.0
    %261 = vmatprep.subr.mxu0 0.0
    %262 = vmatpush1.msra.mxu0 0.0
    %263 = vmatprep.subr.mxu0 0.0
    %264 = vmatpush1.msra.mxu0 0.0
    %265 = vmatprep.subr.mxu0 0.0
    %266 = vmatpush1.msra.mxu0 0.0
    %267 = vmatprep.subr.mxu0 0.0
    %268 = vmatpush1.msra.mxu0 0.0
    %269 = vmatprep.subr.mxu0 0.0
    %270 = vmatpush1.msra.mxu0 0.0
    %271 = vmatprep.subr.mxu0 0.0
    %272 = vmatpush1.msra.mxu0 0.0
    %273 = vmatprep.mubr.f32.mxu0 0.0
    %274 = vmatmul.mubr.f32.gmra.mrb[0].mxu0 %v207
    %v275 = vpop.f32.mrb[0].mxu0
    %v276 = vadd.f32 %v205, %v275
    %v277 = vpop.f32.mrb[0].mxu0
    %278 = vdwg.mxu0
    %279 = vst.msk [vmem:[#allocation7] sm:$0xff] %vm48, %v276
    // Predicated region
    $region18: #{tpu_custom_call.1} parent=1 // pred_check
      _
    $region19: #{tpu_custom_call.1} parent=1 // pred_check_branch
      %281 = sbr.rel (0) target = $region21
    $region20: #{tpu_custom_call.1} parent=1 // pred_region
      %s283 = ssub.s32 128, 128
      %284 = vsyncadd [#allocation4], %s283
      %s286 = sshll.u32 [#allocation7], 4
      %s287 = int_to_ptr.vmem [resolvable:$true] %s286
      %289 = dma.vmem_to_hbm [thread:$0]  %s287, 128, %s2, [#allocation4]
    $region21: #{tpu_custom_call.1} parent=1 // pred_fallthru
      _
    // Predicated region
    $region22: #{tpu_custom_call.1} parent=1 // pred_check
      _
    $region23: #{tpu_custom_call.1} parent=1 // pred_check_branch
      %291 = sbr.rel (0) target = $region25
    $region24: #{tpu_custom_call.1} parent=1 // pred_region
      %292 = dma.done [#allocation4], 128
    $region25: #{tpu_custom_call.1} parent=1 // pred_fallthru
      _
    %293 = vsyncpa [#allocation3], 1
    %294 = vsyncpa [#allocation6], 1
    %295 = vsyncpa [#allocation4], 1

</llo_original>
